<compile_context>
chip_gen: v7x
topology: tpu7x:2x2x1
jax: 0.10.0
libtpu: 0.0.40
codegen_flags: <defaults>
</compile_context>

<pallas_src>
import functools
import math

import jax
import jax.numpy as jnp
from jax.experimental import pallas as pl
from jax.experimental.pallas import tpu as pltpu


def _self_attention_kernel(q_ref, k_ref, v_ref, hms_ref, hmt_ref, w_ref, b_ref,
                           o_ref, *, n_heads):
    """One grid step == one block of TB batch rows (all heads at once).

    q_ref:   (TB, H)      queries (q_len == 1 per batch row)
    k_ref:   (TB, S, H)   keys,   H kept lane-dense (heads NOT pre-split)
    v_ref:   (TB, S, H)   values, H kept lane-dense
    hms_ref: (H, nH)      block-diagonal head map, pre-scaled by 1/sqrt(hd)
    hmt_ref: (nH, H)      unscaled head-map transpose (prob broadcast)
    w_ref:   (H, H)       fc weight, pre-transposed to (in, out)
    b_ref:   (1, H)       fc bias
    o_ref:   (TB, H)      output (lane-dense 2-D block)
    """
    TB, S, H = k_ref.shape
    q = q_ref[...]                      # (TB, H)
    k = k_ref[...]                      # (TB, S, H)
    v = v_ref[...]                      # (TB, S, H)
    head_map_s = hms_ref[...]           # (H, nH)  already has 1/sqrt(hd) folded in
    head_map_t = hmt_ref[...]           # (nH, H)

    # Per-lane q*k products for all heads at once (VPU, H stays in lanes).
    qk = q[:, None, :] * k                                   # (TB, S, H)
    # Segmented reduction over head_dim -> per-head energies, via one matmul:
    #   (TB*S, H) @ (H, nH) = (TB*S, nH); the softmax scale rides in the map.
    e = jnp.dot(qk.reshape(TB * S, H), head_map_s,
                preferred_element_type=jnp.float32)
    e = e.reshape(TB, S, n_heads)                             # (TB, S, nH)

    # Numerically-stable softmax over the key axis (f32 throughout).
    m = jnp.max(e, axis=1, keepdims=True)                     # (TB, 1, nH)
    p = jnp.exp(e - m)                                        # (TB, S, nH)
    l = jnp.sum(p, axis=1, keepdims=True)                     # (TB, 1, nH)
    attn = p * pl.reciprocal(l, approx=True)                  # EUP reciprocal

    # Broadcast per-head probabilities back onto the H lanes:
    #   (TB*S, nH) @ (nH, H) = (TB*S, H)
    attn_full = jnp.dot(attn.reshape(TB * S, n_heads), head_map_t,
                        preferred_element_type=jnp.float32).reshape(TB, S, H)
    # Context = sum over keys of attn * V (head-concat order preserved).
    ctx = jnp.sum(attn_full * v, axis=1)                      # (TB, H)

    # Batched output projection for the whole block: y = ctx @ W^T + b.
    y = jnp.dot(ctx, w_ref[...], preferred_element_type=jnp.float32) + b_ref[...]
    o_ref[...] = y.astype(o_ref.dtype)


def self_attention_forward(query, key, value, fc_w, fc_b, n_heads, block_b=None):
    """Pallas equivalent of SelfAttention.forward(query, key, value, mask=None)."""
    B, S, H = key.shape
    assert H % n_heads == 0
    hd = H // n_heads
    inv_scale = 1.0 / math.sqrt(float(hd))

    # Batch blocking: whole batch in one step when tiny; otherwise pick the
    # largest sublane-aligned block that divides B (biggest tile that fits
    # VMEM wins; K/V blocks here are small).  Re-derive against 64 MiB VMEM
    # on v7x if S*H grows large.
    if block_b is None:
        if B <= 8:
            block_b = B
        else:
            block_b = 8
            for cand in (256, 128, 64, 32, 16, 8):
                if B % cand == 0:
                    block_b = cand
                    break
    assert B % block_b == 0, "TODO(synk): ragged batch blocks not handled"
    grid = (B // block_b,)

    # One-time layout prep (plain XLA, outside the kernel; constants folded).
    w_t = fc_w.T                         # (H_in, H_out)
    b2 = fc_b.reshape(1, H)
    # Block-diagonal head map: head_map[d, h] = 1 iff feature d belongs to head h.
    head_ids = jnp.arange(H, dtype=jnp.int32) // hd
    head_map = (head_ids[:, None]
                == jnp.arange(n_heads, dtype=jnp.int32)[None, :]).astype(jnp.float32)
    head_map_scaled = head_map * inv_scale   # fold softmax scale into the constant
    head_map_t = head_map.T                  # (nH, H), unscaled

    kernel = functools.partial(_self_attention_kernel, n_heads=n_heads)

    out = pl.pallas_call(
        kernel,
        out_shape=jax.ShapeDtypeStruct((B, H), jnp.float32),
        grid=grid,
        in_specs=[
            pl.BlockSpec((block_b, H), lambda i: (i, 0)),
            pl.BlockSpec((block_b, S, H), lambda i: (i, 0, 0)),
            pl.BlockSpec((block_b, S, H), lambda i: (i, 0, 0)),
            # Grid-invariant constants (same block index every step -> DMA'd once).
            pl.BlockSpec((H, n_heads), lambda i: (0, 0)),
            pl.BlockSpec((n_heads, H), lambda i: (0, 0)),
            pl.BlockSpec((H, H), lambda i: (0, 0)),
            pl.BlockSpec((1, H), lambda i: (0, 0)),
        ],
        out_specs=pl.BlockSpec((block_b, H), lambda i: (i, 0)),
        compiler_params=pltpu.CompilerParams(
            dimension_semantics=("parallel",)),
    )(query, key, value, head_map_scaled, head_map_t, w_t, b2)
    return out


if __name__ == "__main__":
    B, S, H, n_heads = 2, 8, 32, 4
    dropout = 0.1   # identity at inference (eval mode)

    root = jax.random.PRNGKey(0)
    ks = jax.random.split(root, 8)
    query = jax.random.normal(ks[0], (B, H), jnp.float32)
    key_in = jax.random.normal(ks[1], (B, S, H), jnp.float32)
    value = jax.random.normal(ks[2], (B, S, H), jnp.float32)

    # Deterministic parameter init (shapes from the module's __init__).
    fc_w = jax.random.normal(ks[3], (H, H), jnp.float32) * 0.1   # nn.Linear(H, H).weight
    fc_b = jax.random.normal(ks[4], (H,), jnp.float32) * 0.1     # nn.Linear(H, H).bias
    w_q = jax.random.normal(ks[5], (H, H), jnp.float32) * 0.1    # defined but unused in forward
    w_k = jax.random.normal(ks[6], (H, H), jnp.float32) * 0.1    # defined but unused in forward
    w_v = jax.random.normal(ks[7], (H, H), jnp.float32) * 0.1    # defined but unused in forward

    out = jax.block_until_ready(
        self_attention_forward(query, key_in, value, fc_w, fc_b, n_heads))

    # Pure-JAX reference (same math as the PyTorch forward with mask=None, eval).
    def _ref(q, k, v, w, b):
        hd = H // n_heads
        Q = q.reshape(B, 1, n_heads, hd).transpose(0, 2, 1, 3)
        K = k.reshape(B, S, n_heads, hd).transpose(0, 2, 1, 3)
        V = v.reshape(B, S, n_heads, hd).transpose(0, 2, 1, 3)
        energy = jnp.einsum('bhqd,bhkd->bhqk', Q, K) / jnp.sqrt(jnp.float32(hd))
        attn = jax.nn.softmax(energy, axis=-1)
        ctx = jnp.einsum('bhqk,bhkd->bhqd', attn, V)
        ctx = ctx.transpose(0, 2, 1, 3).reshape(B, H)
        return ctx @ w.T + b

    expected = _ref(query, key_in, value, fc_w, fc_b)
    assert out.shape == (B, H)
    # Slightly relaxed tolerance: the kernel uses the EUP approximate
    # reciprocal for the softmax normalization.
    assert jnp.allclose(out, expected, atol=1e-2, rtol=1e-2), (out, expected)
    print("KERNEL_OK")
</pallas_src>

<mosaic_0001>
module attributes {stable_mosaic.version = 11 : i64} {
  func.func @_self_attention_kernel(%arg0: i32, %arg1: memref<2x32xf32, #tpu.memory_space<vmem>>, %arg2: memref<2x8x32xf32, #tpu.memory_space<vmem>>, %arg3: memref<2x8x32xf32, #tpu.memory_space<vmem>>, %arg4: memref<32x4xf32, #tpu.memory_space<vmem>>, %arg5: memref<4x32xf32, #tpu.memory_space<vmem>>, %arg6: memref<32x32xf32, #tpu.memory_space<vmem>>, %arg7: memref<1x32xf32, #tpu.memory_space<vmem>>, %arg8: memref<2x32xf32, #tpu.memory_space<vmem>>) attributes {dimension_semantics = [#tpu.dimension_semantics<parallel>], iteration_bounds = array<i64: 1>, scalar_prefetch = 0 : i64, scratch_operands = 0 : i64, tpu.core_type = #tpu.core_type<tc>, window_params = [{transform_indices = @transform_0, window_bounds = array<i64: 2, 32>}, {transform_indices = @transform_1, window_bounds = array<i64: 2, 8, 32>}, {transform_indices = @transform_2, window_bounds = array<i64: 2, 8, 32>}, {pipeline_mode = #tpu.pipeline_mode<synchronous>, transform_indices = @transform_3, window_bounds = array<i64: 32, 4>}, {pipeline_mode = #tpu.pipeline_mode<synchronous>, transform_indices = @transform_4, window_bounds = array<i64: 4, 32>}, {pipeline_mode = #tpu.pipeline_mode<synchronous>, transform_indices = @transform_5, window_bounds = array<i64: 32, 32>}, {pipeline_mode = #tpu.pipeline_mode<synchronous>, transform_indices = @transform_6, window_bounds = array<i64: 1, 32>}, {transform_indices = @transform_7, window_bounds = array<i64: 2, 32>}]} {
    %c0 = arith.constant 0 : index
    %c0_0 = arith.constant 0 : index
    %0 = vector.load %arg1[%c0, %c0_0] : memref<2x32xf32, #tpu.memory_space<vmem>>, vector<2x32xf32>
    %c0_1 = arith.constant 0 : index
    %c0_2 = arith.constant 0 : index
    %c0_3 = arith.constant 0 : index
    %1 = vector.load %arg2[%c0_1, %c0_2, %c0_3] : memref<2x8x32xf32, #tpu.memory_space<vmem>>, vector<2x8x32xf32>
    %c0_4 = arith.constant 0 : index
    %c0_5 = arith.constant 0 : index
    %c0_6 = arith.constant 0 : index
    %2 = vector.load %arg3[%c0_4, %c0_5, %c0_6] : memref<2x8x32xf32, #tpu.memory_space<vmem>>, vector<2x8x32xf32>
    %c0_7 = arith.constant 0 : index
    %c0_8 = arith.constant 0 : index
    %3 = vector.load %arg4[%c0_7, %c0_8] : memref<32x4xf32, #tpu.memory_space<vmem>>, vector<32x4xf32>
    %c0_9 = arith.constant 0 : index
    %c0_10 = arith.constant 0 : index
    %4 = vector.load %arg5[%c0_9, %c0_10] : memref<4x32xf32, #tpu.memory_space<vmem>>, vector<4x32xf32>
    %5 = vector.shape_cast %0 : vector<2x32xf32> to vector<2x1x32xf32>
    %6 = vector.broadcast %5 : vector<2x1x32xf32> to vector<2x8x32xf32>
    %7 = arith.mulf %6, %1 : vector<2x8x32xf32>
    %8 = vector.shape_cast %7 : vector<2x8x32xf32> to vector<16x32xf32>
    %cst = arith.constant dense<0.000000e+00> : vector<16x4xf32>
    %9 = tpu.matmul %8, %3, %cst {dimension_numbers = #tpu.dot_dimension_numbers<[1], [0], [0], [1], [0, 0, 1, 1], [], []>} : vector<16x32xf32>, vector<32x4xf32>, vector<16x4xf32> -> vector<16x4xf32>
    %10 = vector.shape_cast %9 : vector<16x4xf32> to vector<2x8x4xf32>
    %cst_11 = arith.constant dense<0xFF800000> : vector<2x4xf32>
    %11 = vector.multi_reduction <maximumf>, %10, %cst_11 [1] : vector<2x8x4xf32> to vector<2x4xf32>
    %12 = vector.shape_cast %11 : vector<2x4xf32> to vector<2x1x4xf32>
    %13 = vector.broadcast %12 : vector<2x1x4xf32> to vector<2x8x4xf32>
    %14 = arith.subf %10, %13 : vector<2x8x4xf32>
    %15 = math.exp %14 : vector<2x8x4xf32>
    %cst_12 = arith.constant dense<0.000000e+00> : vector<2x4xf32>
    %16 = vector.multi_reduction <add>, %15, %cst_12 [1] : vector<2x8x4xf32> to vector<2x4xf32>
    %17 = vector.shape_cast %16 : vector<2x4xf32> to vector<2x1x4xf32>
    %18 = tpu.reciprocal %17 {approx = true} : vector<2x1x4xf32> -> vector<2x1x4xf32>
    %19 = vector.broadcast %18 : vector<2x1x4xf32> to vector<2x8x4xf32>
    %20 = arith.mulf %15, %19 : vector<2x8x4xf32>
    %21 = vector.shape_cast %20 : vector<2x8x4xf32> to vector<16x4xf32>
    %cst_13 = arith.constant dense<0.000000e+00> : vector<16x32xf32>
    %22 = tpu.matmul %21, %4, %cst_13 {dimension_numbers = #tpu.dot_dimension_numbers<[1], [0], [0], [1], [0, 0, 1, 1], [], []>} : vector<16x4xf32>, vector<4x32xf32>, vector<16x32xf32> -> vector<16x32xf32>
    %23 = vector.shape_cast %22 : vector<16x32xf32> to vector<2x8x32xf32>
    %24 = arith.mulf %23, %2 : vector<2x8x32xf32>
    %cst_14 = arith.constant dense<0.000000e+00> : vector<2x32xf32>
    %25 = vector.multi_reduction <add>, %24, %cst_14 [1] : vector<2x8x32xf32> to vector<2x32xf32>
    %c0_15 = arith.constant 0 : index
    %c0_16 = arith.constant 0 : index
    %26 = vector.load %arg6[%c0_15, %c0_16] : memref<32x32xf32, #tpu.memory_space<vmem>>, vector<32x32xf32>
    %cst_17 = arith.constant dense<0.000000e+00> : vector<2x32xf32>
    %27 = tpu.matmul %25, %26, %cst_17 {dimension_numbers = #tpu.dot_dimension_numbers<[1], [0], [0], [1], [0, 0, 1, 1], [], []>} : vector<2x32xf32>, vector<32x32xf32>, vector<2x32xf32> -> vector<2x32xf32>
    %c0_18 = arith.constant 0 : index
    %c0_19 = arith.constant 0 : index
    %28 = vector.load %arg7[%c0_18, %c0_19] : memref<1x32xf32, #tpu.memory_space<vmem>>, vector<1x32xf32>
    %29 = vector.broadcast %28 : vector<1x32xf32> to vector<2x32xf32>
    %30 = arith.addf %27, %29 : vector<2x32xf32>
    %c0_20 = arith.constant 0 : index
    %c0_21 = arith.constant 0 : index
    %31 = vector.load %arg8[%c0_20, %c0_21] : memref<2x32xf32, #tpu.memory_space<vmem>>, vector<2x32xf32>
    tpu.vector_store %arg8[%c0_20, %c0_21], %30 {strides = array<i32>} : memref<2x32xf32, #tpu.memory_space<vmem>>, vector<2x32xf32>,
    return
  }
  func.func @transform_0(%arg0: i32) -> (i32, i32) {
    %c0_i32 = arith.constant 0 : i32
    %c0_i32_0 = arith.constant 0 : i32
    return %arg0, %c0_i32 : i32, i32
  }
  func.func @transform_1(%arg0: i32) -> (i32, i32, i32) {
    %c0_i32 = arith.constant 0 : i32
    %c0_i32_0 = arith.constant 0 : i32
    %c0_i32_1 = arith.constant 0 : i32
    return %arg0, %c0_i32, %c0_i32_0 : i32, i32, i32
  }
  func.func @transform_2(%arg0: i32) -> (i32, i32, i32) {
    %c0_i32 = arith.constant 0 : i32
    %c0_i32_0 = arith.constant 0 : i32
    %c0_i32_1 = arith.constant 0 : i32
    return %arg0, %c0_i32, %c0_i32_0 : i32, i32, i32
  }
  func.func @transform_3(%arg0: i32) -> (i32, i32) {
    %c0_i32 = arith.constant 0 : i32
    %c0_i32_0 = arith.constant 0 : i32
    %c0_i32_1 = arith.constant 0 : i32
    return %c0_i32, %c0_i32_0 : i32, i32
  }
  func.func @transform_4(%arg0: i32) -> (i32, i32) {
    %c0_i32 = arith.constant 0 : i32
    %c0_i32_0 = arith.constant 0 : i32
    %c0_i32_1 = arith.constant 0 : i32
    return %c0_i32, %c0_i32_0 : i32, i32
  }
  func.func @transform_5(%arg0: i32) -> (i32, i32) {
    %c0_i32 = arith.constant 0 : i32
    %c0_i32_0 = arith.constant 0 : i32
    %c0_i32_1 = arith.constant 0 : i32
    return %c0_i32, %c0_i32_0 : i32, i32
  }
  func.func @transform_6(%arg0: i32) -> (i32, i32) {
    %c0_i32 = arith.constant 0 : i32
    %c0_i32_0 = arith.constant 0 : i32
    %c0_i32_1 = arith.constant 0 : i32
    return %c0_i32, %c0_i32_0 : i32, i32
  }
  func.func @transform_7(%arg0: i32) -> (i32, i32) {
    %c0_i32 = arith.constant 0 : i32
    %c0_i32_0 = arith.constant 0 : i32
    return %arg0, %c0_i32 : i32, i32
  }
}

</mosaic_0001>

<llo_original>
// kernel: tpu_custom_call.1
$region0: #{tpu_custom_call.1}
  #allocation0 [shape = 'u32[]', space=smem, size = 0x4, offset = 0x4, fixed_abs, tag = 'smem constant byte address 0x4 - core index']
  #allocation1 [shape = 'u32[144,128]{1,0:T(1,128)}', space=vmem, size = 0x12000, scoped, tag = 'internal scratch']
  %s0 = inlined_call_operand.vmem [shape: f32[2,32], index: 0, kind: input, shape index: {}]
  %s1 = inlined_call_operand.vmem [shape: f32[2,8,32], index: 1, kind: input, shape index: {}]
  %s2 = inlined_call_operand.hbm [shape: f32[2,8,32], index: 2, kind: input, shape index: {}]
  %s3 = inlined_call_operand.vmem [shape: f32[32,4], index: 3, kind: input, shape index: {}]
  %s4 = inlined_call_operand.vmem [shape: f32[4,32], index: 4, kind: input, shape index: {}]
  %s5 = inlined_call_operand.vmem [shape: f32[32,32], index: 5, kind: input, shape index: {}]
  %s6 = inlined_call_operand.vmem [shape: f32[1,32], index: 6, kind: input, shape index: {}]
  %s7 = inlined_call_operand.hbm [shape: f32[2,32], index: 7, kind: output, shape index: {}]
  %s8 = sld [smem:[#allocation0]]
  $region42: #{tpu_custom_call.1} parent=0
    _
  %s10 = ssub.s32 1, %s8
  %s11 = scalar_select 0, %s10, %s8
  $region1: #{tpu_custom_call.1} parent=0
    #allocation2 [shape = 'u8[8192]{0}', space=vmem, size = 0x2000, scoped, tag = 'input window, operand 2, single buffered']
    #allocation3 [shape = 's32[1]{0}', space=sflag, size = 0x4, scoped, tag = 'scoped memory for tpu_custom_call.1']
    #allocation4 [shape = 's32[1]{0}', space=sflag, size = 0x4, scoped, tag = 'scoped memory for tpu_custom_call.1']
    #allocation5 [shape = 'u8[1024]{0}', space=vmem, size = 0x400, scoped, tag = 'output window, operand 0, single buffered']
    %12 = vsyncpa [#allocation3], 0
    %13 = vsyncpa [#allocation4], 0
    // Predicated region
    $region2: #{tpu_custom_call.1} parent=1 // pred_check
      _
    $region3: #{tpu_custom_call.1} parent=1 // pred_check_branch
      %15 = sbr.rel (0) target = $region5
    $region4: #{tpu_custom_call.1} parent=1 // pred_region
      _
    $region5: #{tpu_custom_call.1} parent=1 // pred_fallthru
      _
    // Predicated region
    $region6: #{tpu_custom_call.1} parent=1 // pred_check
      _
    $region7: #{tpu_custom_call.1} parent=1 // pred_check_branch
      %17 = sbr.rel (0) target = $region9
    $region8: #{tpu_custom_call.1} parent=1 // pred_region
      _
    $region9: #{tpu_custom_call.1} parent=1 // pred_fallthru
      _
    // Predicated region
    $region10: #{tpu_custom_call.1} parent=1 // pred_check
      _
    $region11: #{tpu_custom_call.1} parent=1 // pred_check_branch
      %19 = sbr.rel (0) target = $region13
    $region12: #{tpu_custom_call.1} parent=1 // pred_region
      %s21 = ssub.s32 256, 256
      %22 = vsyncadd [#allocation3], %s21
      %s23 = sshll.u32 [#allocation2], 4
      %s24 = int_to_ptr.vmem [resolvable:$true] %s23
      %29 = dma.hbm_to_vmem [thread:$0]  %s2, 256, %s24, [#allocation3], 128, 128, 8
    $region13: #{tpu_custom_call.1} parent=1 // pred_fallthru
      _
    // Predicated region
    $region14: #{tpu_custom_call.1} parent=1 // pred_check
      _
    $region15: #{tpu_custom_call.1} parent=1 // pred_check_branch
      %31 = sbr.rel (0) target = $region17
    $region16: #{tpu_custom_call.1} parent=1 // pred_region
      _
    $region17: #{tpu_custom_call.1} parent=1 // pred_fallthru
      _
    // Predicated region
    $region18: #{tpu_custom_call.1} parent=1 // pred_check
      _
    $region19: #{tpu_custom_call.1} parent=1 // pred_check_branch
      %33 = sbr.rel (0) target = $region21
    $region20: #{tpu_custom_call.1} parent=1 // pred_region
      _
    $region21: #{tpu_custom_call.1} parent=1 // pred_fallthru
      _
    // Predicated region
    $region22: #{tpu_custom_call.1} parent=1 // pred_check
      _
    $region23: #{tpu_custom_call.1} parent=1 // pred_check_branch
      %35 = sbr.rel (0) target = $region25
    $region24: #{tpu_custom_call.1} parent=1 // pred_region
      _
    $region25: #{tpu_custom_call.1} parent=1 // pred_fallthru
      _
    // Predicated region
    $region26: #{tpu_custom_call.1} parent=1 // pred_check
      _
    $region27: #{tpu_custom_call.1} parent=1 // pred_check_branch
      %37 = sbr.rel (0) target = $region29
    $region28: #{tpu_custom_call.1} parent=1 // pred_region
      _
    $region29: #{tpu_custom_call.1} parent=1 // pred_fallthru
      _
    // Predicated region
    $region30: #{tpu_custom_call.1} parent=1 // pred_check
      _
    $region31: #{tpu_custom_call.1} parent=1 // pred_check_branch
      %39 = sbr.rel (0) target = $region33
    $region32: #{tpu_custom_call.1} parent=1 // pred_region
      %40 = dma.done [#allocation3], 256
    $region33: #{tpu_custom_call.1} parent=1 // pred_fallthru
      _
    %v41 = vld [vmem:[%s0] sm:$0x3]
    %v42 = vld [vmem:[%s1] sm:$0xff]
    %v43 = vld [vmem:[%s1 + $0x8] sm:$0xff]
    %v44 = vld [vmem:[#allocation2] sm:$0xff]
    %v45 = vld [vmem:[#allocation2 + $0x8] sm:$0xff]
    %v46 = vld [vmem:[%s3] sm:$0xff]
    %v47 = vld [vmem:[%s3 + $0x8] sm:$0xff]
    %v48 = vld [vmem:[%s3 + $0x10] sm:$0xff]
    %v49 = vld [vmem:[%s3 + $0x18] sm:$0xff]
    %v50 = vld [vmem:[%s4] sm:$0xf]
    %v53 = vunpack.c.l.s4 1966171168
    %v54 = vunpack.c.0.s8 %v53
    %v55 = vlaneseq
    %v56 = vshrl.u32 %v55, 7
    %v57 = vsub.s32 %v54, %v56
    %v58 = vrot.slane %v41, %v57
    %v59 = vcombine.high %v58, %v58
    %v61 = vunpack.c.l.s4 1966171168
    %v62 = vunpack.c.0.s8 %v61
    %v63 = vlaneseq
    %v64 = vshrl.u32 %v63, 7
    %v65 = vsub.s32 %v62, %v64
    %v66 = vrot.slane %v58, %v65
    %v68 = vunpack.c.l.s4 1966171168
    %v69 = vunpack.c.0.s8 %v68
    %v70 = vlaneseq
    %v71 = vshrl.u32 %v70, 7
    %v72 = vsub.s32 %v69, %v71
    %v73 = vrot.slane %v59, %v72
    %v74 = vlaneseq
    %v75 = vshrl.u32 %v74, 7
    %v76 = vsub.s32 0, %v75
    %v77 = vrot.slane %v66, %v76
    %v78 = vlaneseq
    %v79 = vshrl.u32 %v78, 7
    %v80 = vsub.s32 0, %v79
    %v81 = vrot.slane %v73, %v80
    %v84 = vmul.f32 %v77, %v42
    %v85 = vmul.f32 %v81, %v43
    %vm86 = vcmask 261120
    %v88 = vsel %vm86, %v84, 0
    %v91 = vsel %vm86, %v85, 0
    %93 = vmatprep.subr.mxu0 0.0
    %94 = vmatpush1.msra.mxu0 %v46
    %95 = vmatprep.subr.mxu0 0.0
    %96 = vmatpush1.msra.mxu0 %v47
    %97 = vmatprep.subr.mxu0 0.0
    %98 = vmatpush1.msra.mxu0 %v48
    %99 = vmatprep.subr.mxu0 0.0
    %100 = vmatpush1.msra.mxu0 %v49
    %101 = vmatprep.subr.mxu0 0.0
    %102 = vmatpush1.msra.mxu0 0.0
    %103 = vmatprep.subr.mxu0 0.0
    %104 = vmatpush1.msra.mxu0 0.0
    %105 = vmatprep.subr.mxu0 0.0
    %106 = vmatpush1.msra.mxu0 0.0
    %107 = vmatprep.subr.mxu0 0.0
    %108 = vmatpush1.msra.mxu0 0.0
    %109 = vmatprep.subr.mxu0 0.0
    %110 = vmatpush1.msra.mxu0 0.0
    %111 = vmatprep.subr.mxu0 0.0
    %112 = vmatpush1.msra.mxu0 0.0
    %113 = vmatprep.subr.mxu0 0.0
    %114 = vmatpush1.msra.mxu0 0.0
    %115 = vmatprep.subr.mxu0 0.0
    %116 = vmatpush1.msra.mxu0 0.0
    %117 = vmatprep.subr.mxu0 0.0
    %118 = vmatpush1.msra.mxu0 0.0
    %119 = vmatprep.subr.mxu0 0.0
    %120 = vmatpush1.msra.mxu0 0.0
    %121 = vmatprep.subr.mxu0 0.0
    %122 = vmatpush1.msra.mxu0 0.0
    %123 = vmatprep.subr.mxu0 0.0
    %124 = vmatpush1.msra.mxu0 0.0
    %125 = vmatprep.subr.mxu0 0.0
    %126 = vmatpush1.msra.mxu0 0.0
    %127 = vmatprep.subr.mxu0 0.0
    %128 = vmatpush1.msra.mxu0 0.0
    %129 = vmatprep.subr.mxu0 0.0
    %130 = vmatpush1.msra.mxu0 0.0
    %131 = vmatprep.subr.mxu0 0.0
    %132 = vmatpush1.msra.mxu0 0.0
    %133 = vmatprep.subr.mxu0 0.0
    %134 = vmatpush1.msra.mxu0 0.0
    %135 = vmatprep.subr.mxu0 0.0
    %136 = vmatpush1.msra.mxu0 0.0
    %137 = vmatprep.subr.mxu0 0.0
    %138 = vmatpush1.msra.mxu0 0.0
    %139 = vmatprep.subr.mxu0 0.0
    %140 = vmatpush1.msra.mxu0 0.0
    %141 = vmatprep.subr.mxu0 0.0
    %142 = vmatpush1.msra.mxu0 0.0
    %143 = vmatprep.subr.mxu0 0.0
    %144 = vmatpush1.msra.mxu0 0.0
    %145 = vmatprep.subr.mxu0 0.0
    %146 = vmatpush1.msra.mxu0 0.0
    %147 = vmatprep.subr.mxu0 0.0
    %148 = vmatpush1.msra.mxu0 0.0
    %149 = vmatprep.subr.mxu0 0.0
    %150 = vmatpush1.msra.mxu0 0.0
    %151 = vmatprep.subr.mxu0 0.0
    %152 = vmatpush1.msra.mxu0 0.0
    %153 = vmatprep.subr.mxu0 0.0
    %154 = vmatpush1.msra.mxu0 0.0
    %155 = vmatprep.subr.mxu0 0.0
    %156 = vmatpush1.msra.mxu0 0.0
    %157 = vmatprep.mubr.f32.mxu0 0.0
    %158 = vmatmul.mubr.f32.gmra.mrb[0].mxu0 %v88
    %v159 = vpop.f32.mrb[0].mxu0
    %v160 = vadd.f32 0.0, %v159
    %v161 = vpop.f32.mrb[0].mxu0
    %162 = vmatprep.mubr.f32.mxu0 0.0
    %163 = vmatmul.mubr.f32.gmra.mrb[0].mxu0 %v91
    %v164 = vpop.f32.mrb[0].mxu0
    %v165 = vadd.f32 0.0, %v164
    %v166 = vpop.f32.mrb[0].mxu0
    %167 = vdwg.mxu0
    %vm168 = vcmask 31744
    %v169 = vsel %vm168, %v160, -inf
    %v170 = vrot.slane %v169, 4
    %v171 = vmax.f32 %v169, %v170
    %v172 = vrot.slane %v171, 2
    %v173 = vmax.f32 %v171, %v172
    %v174 = vrot.slane %v173, 1
    %v175 = vmax.f32 %v173, %v174
    %v176 = vsel %vm168, %v165, -inf
    %v177 = vrot.slane %v176, 4
    %v178 = vmax.f32 %v176, %v177
    %v179 = vrot.slane %v178, 2
    %v180 = vmax.f32 %v178, %v179
    %v181 = vrot.slane %v180, 1
    %v182 = vmax.f32 %v180, %v181
    %v183 = vsub.f32 %v160, %v175
    %v184 = vsub.f32 %v165, %v182
    %v185 = vmul.f32 %v183, 1.442695
    %v186 = vpow.pop %v185
    %v187 = vmul.f32 %v184, 1.442695
    %v188 = vpow.pop %v187
    %v189 = vsel %vm168, %v186, 0.0
    %v190 = vrot.slane %v189, 4
    %v191 = vadd.f32 %v189, %v190
    %v192 = vrot.slane %v191, 2
    %v193 = vadd.f32 %v191, %v192
    %v194 = vrot.slane %v193, 1
    %v195 = vadd.f32 %v193, %v194
    %v196 = vsel %vm168, %v188, 0.0
    %v197 = vrot.slane %v196, 4
    %v198 = vadd.f32 %v196, %v197
    %v199 = vrot.slane %v198, 2
    %v200 = vadd.f32 %v198, %v199
    %v201 = vrot.slane %v200, 1
    %v202 = vadd.f32 %v200, %v201
    %v203 = vrcp.pop %v195
    %v204 = vrcp.pop %v202
    %v205 = vmul.f32 %v186, %v203
    %v206 = vmul.f32 %v188, %v204
    %v208 = vsel %vm168, %v205, 0
    %v211 = vsel %vm168, %v206, 0
    %vm213 = vcmask 1043456
    %v215 = vsel %vm213, %v50, 0
    %217 = vmatprep.subr.mxu0 0.0
    %218 = vmatpush1.msra.mxu0 %v215
    %219 = vmatprep.subr.mxu0 0.0
    %220 = vmatpush1.msra.mxu0 0.0
    %221 = vmatprep.subr.mxu0 0.0
    %222 = vmatpush1.msra.mxu0 0.0
    %223 = vmatprep.subr.mxu0 0.0
    %224 = vmatpush1.msra.mxu0 0.0
    %225 = vmatprep.subr.mxu0 0.0
    %226 = vmatpush1.msra.mxu0 0.0
    %227 = vmatprep.subr.mxu0 0.0
    %228 = vmatpush1.msra.mxu0 0.0
    %229 = vmatprep.subr.mxu0 0.0
    %230 = vmatpush1.msra.mxu0 0.0
    %231 = vmatprep.subr.mxu0 0.0
    %232 = vmatpush1.msra.mxu0 0.0
    %233 = vmatprep.subr.mxu0 0.0
    %234 = vmatpush1.msra.mxu0 0.0
    %235 = vmatprep.subr.mxu0 0.0
    %236 = vmatpush1.msra.mxu0 0.0
    %237 = vmatprep.subr.mxu0 0.0
    %238 = vmatpush1.msra.mxu0 0.0
    %239 = vmatprep.subr.mxu0 0.0
    %240 = vmatpush1.msra.mxu0 0.0
    %241 = vmatprep.subr.mxu0 0.0
    %242 = vmatpush1.msra.mxu0 0.0
    %243 = vmatprep.subr.mxu0 0.0
    %244 = vmatpush1.msra.mxu0 0.0
    %245 = vmatprep.subr.mxu0 0.0
    %246 = vmatpush1.msra.mxu0 0.0
    %247 = vmatprep.subr.mxu0 0.0
    %248 = vmatpush1.msra.mxu0 0.0
    %249 = vmatprep.subr.mxu0 0.0
    %250 = vmatpush1.msra.mxu0 0.0
    %251 = vmatprep.subr.mxu0 0.0
    %252 = vmatpush1.msra.mxu0 0.0
    %253 = vmatprep.subr.mxu0 0.0
    %254 = vmatpush1.msra.mxu0 0.0
    %255 = vmatprep.subr.mxu0 0.0
    %256 = vmatpush1.msra.mxu0 0.0
    %257 = vmatprep.subr.mxu0 0.0
    %258 = vmatpush1.msra.mxu0 0.0
    %259 = vmatprep.subr.mxu0 0.0
    %260 = vmatpush1.msra.mxu0 0.0
    %261 = vmatprep.subr.mxu0 0.0
    %262 = vmatpush1.msra.mxu0 0.0
    %263 = vmatprep.subr.mxu0 0.0
    %264 = vmatpush1.msra.mxu0 0.0
    %265 = vmatprep.subr.mxu0 0.0
    %266 = vmatpush1.msra.mxu0 0.0
    %267 = vmatprep.subr.mxu0 0.0
    %268 = vmatpush1.msra.mxu0 0.0
    %269 = vmatprep.subr.mxu0 0.0
    %270 = vmatpush1.msra.mxu0 0.0
    %271 = vmatprep.subr.mxu0 0.0
    %272 = vmatpush1.msra.mxu0 0.0
    %273 = vmatprep.subr.mxu0 0.0
    %274 = vmatpush1.msra.mxu0 0.0
    %275 = vmatprep.subr.mxu0 0.0
    %276 = vmatpush1.msra.mxu0 0.0
    %277 = vmatprep.subr.mxu0 0.0
    %278 = vmatpush1.msra.mxu0 0.0
    %279 = vmatprep.subr.mxu0 0.0
    %280 = vmatpush1.msra.mxu0 0.0
    %281 = vmatprep.mubr.f32.mxu0 0.0
    %282 = vmatmul.mubr.f32.gmra.mrb[0].mxu0 %v208
    %v283 = vpop.f32.mrb[0].mxu0
    %v284 = vadd.f32 0.0, %v283
    %v285 = vpop.f32.mrb[0].mxu0
    %286 = vmatprep.mubr.f32.mxu0 0.0
    %287 = vmatmul.mubr.f32.gmra.mrb[0].mxu0 %v211
    %v288 = vpop.f32.mrb[0].mxu0
    %v289 = vadd.f32 0.0, %v288
    %v290 = vpop.f32.mrb[0].mxu0
    %291 = vdwg.mxu0
    %v292 = vmul.f32 %v284, %v44
    %v293 = vmul.f32 %v289, %v45
    %v294 = vsel %vm86, %v292, 0.0
    %v295 = vrot.slane %v294, 4
    %v296 = vadd.f32 %v294, %v295
    %v297 = vrot.slane %v296, 2
    %v298 = vadd.f32 %v296, %v297
    %v299 = vrot.slane %v298, 1
    %v300 = vadd.f32 %v298, %v299
    %v301 = vsel %vm86, %v293, 0.0
    %v302 = vrot.slane %v301, 4
    %v303 = vadd.f32 %v301, %v302
    %v304 = vrot.slane %v303, 2
    %v305 = vadd.f32 %v303, %v304
    %v306 = vrot.slane %v305, 1
    %v307 = vadd.f32 %v305, %v306
    %v308 = vld [vmem:[%s5] sm:$0xff]
    %v309 = vld [vmem:[%s5 + $0x8] sm:$0xff]
    %v310 = vld [vmem:[%s5 + $0x10] sm:$0xff]
    %v311 = vld [vmem:[%s5 + $0x18] sm:$0xff]
    %v312 = vld [vmem:[%s6] sm:$0x1]
    %v314 = vlaneseq
    %v315 = vshrl.u32 %v314, 7
    %v316 = vsub.s32 0, %v315
    %v317 = vrot.slane %v312, %v316
    %vm321 = vcmask 1041409
    %v322 = vsel %vm321, %v307, %v300
    %v323 = vsel %vm86, %v322, 0
    %325 = vmatprep.subr.mxu0 0.0
    %326 = vmatpush1.msra.mxu0 %v308
    %327 = vmatprep.subr.mxu0 0.0
    %328 = vmatpush1.msra.mxu0 %v309
    %329 = vmatprep.subr.mxu0 0.0
    %330 = vmatpush1.msra.mxu0 %v310
    %331 = vmatprep.subr.mxu0 0.0
    %332 = vmatpush1.msra.mxu0 %v311
    %333 = vmatprep.subr.mxu0 0.0
    %334 = vmatpush1.msra.mxu0 0.0
    %335 = vmatprep.subr.mxu0 0.0
    %336 = vmatpush1.msra.mxu0 0.0
    %337 = vmatprep.subr.mxu0 0.0
    %338 = vmatpush1.msra.mxu0 0.0
    %339 = vmatprep.subr.mxu0 0.0
    %340 = vmatpush1.msra.mxu0 0.0
    %341 = vmatprep.subr.mxu0 0.0
    %342 = vmatpush1.msra.mxu0 0.0
    %343 = vmatprep.subr.mxu0 0.0
    %344 = vmatpush1.msra.mxu0 0.0
    %345 = vmatprep.subr.mxu0 0.0
    %346 = vmatpush1.msra.mxu0 0.0
    %347 = vmatprep.subr.mxu0 0.0
    %348 = vmatpush1.msra.mxu0 0.0
    %349 = vmatprep.subr.mxu0 0.0
    %350 = vmatpush1.msra.mxu0 0.0
    %351 = vmatprep.subr.mxu0 0.0
    %352 = vmatpush1.msra.mxu0 0.0
    %353 = vmatprep.subr.mxu0 0.0
    %354 = vmatpush1.msra.mxu0 0.0
    %355 = vmatprep.subr.mxu0 0.0
    %356 = vmatpush1.msra.mxu0 0.0
    %357 = vmatprep.subr.mxu0 0.0
    %358 = vmatpush1.msra.mxu0 0.0
    %359 = vmatprep.subr.mxu0 0.0
    %360 = vmatpush1.msra.mxu0 0.0
    %361 = vmatprep.subr.mxu0 0.0
    %362 = vmatpush1.msra.mxu0 0.0
    %363 = vmatprep.subr.mxu0 0.0
    %364 = vmatpush1.msra.mxu0 0.0
    %365 = vmatprep.subr.mxu0 0.0
    %366 = vmatpush1.msra.mxu0 0.0
    %367 = vmatprep.subr.mxu0 0.0
    %368 = vmatpush1.msra.mxu0 0.0
    %369 = vmatprep.subr.mxu0 0.0
    %370 = vmatpush1.msra.mxu0 0.0
    %371 = vmatprep.subr.mxu0 0.0
    %372 = vmatpush1.msra.mxu0 0.0
    %373 = vmatprep.subr.mxu0 0.0
    %374 = vmatpush1.msra.mxu0 0.0
    %375 = vmatprep.subr.mxu0 0.0
    %376 = vmatpush1.msra.mxu0 0.0
    %377 = vmatprep.subr.mxu0 0.0
    %378 = vmatpush1.msra.mxu0 0.0
    %379 = vmatprep.subr.mxu0 0.0
    %380 = vmatpush1.msra.mxu0 0.0
    %381 = vmatprep.subr.mxu0 0.0
    %382 = vmatpush1.msra.mxu0 0.0
    %383 = vmatprep.subr.mxu0 0.0
    %384 = vmatpush1.msra.mxu0 0.0
    %385 = vmatprep.subr.mxu0 0.0
    %386 = vmatpush1.msra.mxu0 0.0
    %387 = vmatprep.subr.mxu0 0.0
    %388 = vmatpush1.msra.mxu0 0.0
    %389 = vmatprep.mubr.f32.mxu0 0.0
    %390 = vmatmul.mubr.f32.gmra.mrb[0].mxu0 %v323
    %v391 = vpop.f32.mrb[0].mxu0
    %v392 = vadd.f32 %v317, %v391
    %v393 = vpop.f32.mrb[0].mxu0
    %394 = vdwg.mxu0
    %vm395 = vcmask 254976
    %396 = vst.msk [vmem:[#allocation5] sm:$0x3] %vm395, %v392
    // Predicated region
    $region34: #{tpu_custom_call.1} parent=1 // pred_check
      _
    $region35: #{tpu_custom_call.1} parent=1 // pred_check_branch
      %398 = sbr.rel (0) target = $region37
    $region36: #{tpu_custom_call.1} parent=1 // pred_region
      %s400 = ssub.s32 32, 32
      %401 = vsyncadd [#allocation4], %s400
      %s403 = sshll.u32 [#allocation5], 4
      %s404 = int_to_ptr.vmem [resolvable:$true] %s403
      %406 = dma.vmem_to_hbm [thread:$0]  %s404, 32, %s7, [#allocation4]
    $region37: #{tpu_custom_call.1} parent=1 // pred_fallthru
      _
    // Predicated region
    $region38: #{tpu_custom_call.1} parent=1 // pred_check
      _
    $region39: #{tpu_custom_call.1} parent=1 // pred_check_branch
      %408 = sbr.rel (0) target = $region41
    $region40: #{tpu_custom_call.1} parent=1 // pred_region
      %409 = dma.done [#allocation4], 32
    $region41: #{tpu_custom_call.1} parent=1 // pred_fallthru
      _
    %410 = vsyncpa [#allocation3], 1
    %411 = vsyncpa [#allocation4], 1

</llo_original>
